<compile_context>
chip_gen: v7x
topology: tpu7x:2x2x1
jax: 0.10.0
libtpu: 0.0.40
codegen_flags: <defaults>
</compile_context>

<pallas_src>
import functools

import jax
import jax.numpy as jnp
from jax import lax
from jax.experimental import pallas as pl
from jax.experimental.pallas import tpu as pltpu


# ------------------------------- kernel body ---------------------------------
def _layernorm_kernel(x_ref, g_ref, o_ref, *, eps):
    """Channel LayerNorm on one (Bb, C, Nt) tile; reduction over the C axis."""
    x = x_ref[...].astype(jnp.float32)               # (Bb, C, Nt) f32 stats
    g = g_ref[...].astype(jnp.float32)                # (1,  C, 1)
    mean = jnp.mean(x, axis=1, keepdims=True)         # (Bb, 1, Nt)
    var = jnp.mean((x - mean) ** 2, axis=1, keepdims=True)   # unbiased=False
    y = (x - mean) * lax.rsqrt(var + eps) * g
    o_ref[...] = y.astype(o_ref.dtype)


# ------------------------------ tiling helpers --------------------------------
def _divisors(n):
    divs = set()
    i = 1
    while i * i <= n:
        if n % i == 0:
            divs.add(i)
            divs.add(n // i)
        i += 1
    return sorted(divs)


def _pick_blocks(B, C, N, itemsize, target_bytes):
    """Pick (b_block, n_tile) so the x tile is ~target_bytes, divides the array
    exactly (no ragged blocks), and the grid keeps >=2 parallel steps when
    the shape allows it (v7x two-TensorCore sharding)."""
    slab_bytes = C * N * itemsize                      # one batch element, full N

    if slab_bytes <= target_bytes:
        # Full-N slabs; grow b_block toward the byte budget.
        n_tile = N
        max_b = max(1, target_bytes // slab_bytes)
        # Keep at least 2 grid steps over B for megacore (when B >= 2).
        cap = B if B < 2 else max(1, B // 2)
        cap = min(cap, max_b)
        b_block = max(d for d in _divisors(B) if d <= cap)
        # B == 1 and full-N slab -> grid would be (1, 1); split N in half if
        # it stays lane-dense and sizeable, so both v7x TCs get work.
        if B == 1 and b_block == 1 and n_tile == N:
            if N % 256 == 0 and slab_bytes >= (1 << 20):
                n_tile = N // 2
    else:
        # Single-batch slab is too big: tile N with an exact, lane-dense tile.
        b_block = 1
        max_elems = max(1, target_bytes // (C * itemsize))
        cands = [d for d in _divisors(N) if d <= max_elems and d % 128 == 0]
        if not cands:
            cands = [d for d in _divisors(N) if d <= max_elems]
        n_tile = max(cands) if cands else N
    return b_block, n_tile


# -------------------------------- wrapper -------------------------------------
def layernorm_ncw(x, g):
    """x: (B, C, N) NCW tensor, g: (1, C, 1) gain. Returns (B, C, N)."""
    B, C, N = x.shape
    assert g.shape == (1, C, 1), g.shape
    assert x.dtype in (jnp.float32, jnp.bfloat16, jnp.float16), x.dtype

    # dtype-dependent eps, same rule as the PyTorch module.
    eps = 1e-5 if x.dtype == jnp.float32 else 1e-3

    itemsize = jnp.dtype(x.dtype).itemsize
    # ~4 MiB x tile: double-buffered input + output (~4x) stays well inside
    # the 32 MiB VMEM limit below on every generation (v5e/v6e/v7x).
    TARGET_BYTES = 4 << 20
    b_block, n_tile = _pick_blocks(B, C, N, itemsize, TARGET_BYTES)

    grid = (B // b_block, N // n_tile)

    kernel = functools.partial(_layernorm_kernel, eps=eps)
    return pl.pallas_call(
        kernel,
        out_shape=jax.ShapeDtypeStruct((B, C, N), x.dtype),
        grid=grid,
        in_specs=[
            pl.BlockSpec((b_block, C, n_tile), lambda b, n: (b, 0, n)),  # x
            pl.BlockSpec((1, C, 1), lambda b, n: (0, 0, 0)),             # g
        ],
        out_specs=pl.BlockSpec((b_block, C, n_tile), lambda b, n: (b, 0, n)),
        compiler_params=pltpu.CompilerParams(
            dimension_semantics=("parallel", "parallel"),
            vmem_limit_bytes=32 << 20),
    )(x, g)


# ---------------------------- pure-JAX reference ------------------------------
def _ref_layernorm(x, g):
    eps = 1e-5 if x.dtype == jnp.float32 else 1e-3
    xf = x.astype(jnp.float32)
    mean = xf.mean(axis=1, keepdims=True)
    var = ((xf - mean) ** 2).mean(axis=1, keepdims=True)   # unbiased=False
    y = (xf - mean) * lax.rsqrt(var + eps) * g.astype(jnp.float32)
    return y.astype(x.dtype)


# ---------------------------------- main ---------------------------------------
if __name__ == "__main__":
    B, C, N = 2, 32, 128   # batch, channels (normalized dim), spatial/sequence

    key = jax.random.PRNGKey(0)
    kx, kg = jax.random.split(key)
    x = jax.random.normal(kx, (B, C, N), jnp.float32)              # NCW input
    g = 1.0 + 0.1 * jax.random.normal(kg, (1, C, 1), jnp.float32)  # gain param

    out = layernorm_ncw(x, g)
    out = jax.block_until_ready(out)

    ref = _ref_layernorm(x, g)
    assert out.shape == (B, C, N), out.shape
    assert jnp.allclose(out, ref, rtol=1e-5, atol=1e-5), \
        float(jnp.max(jnp.abs(out - ref)))

    print("KERNEL_OK")
</pallas_src>

<mosaic_0001>
module attributes {stable_mosaic.version = 11 : i64} {
  func.func @_layernorm_kernel(%arg0: i32, %arg1: i32, %arg2: memref<1x32x128xf32, #tpu.memory_space<vmem>>, %arg3: memref<1x32x1xf32, #tpu.memory_space<vmem>>, %arg4: memref<1x32x128xf32, #tpu.memory_space<vmem>>) attributes {dimension_semantics = [#tpu.dimension_semantics<parallel>, #tpu.dimension_semantics<parallel>], iteration_bounds = array<i64: 2, 1>, scalar_prefetch = 0 : i64, scratch_operands = 0 : i64, tpu.core_type = #tpu.core_type<tc>, window_params = [{transform_indices = @transform_0, window_bounds = array<i64: 1, 32, 128>}, {pipeline_mode = #tpu.pipeline_mode<synchronous>, transform_indices = @transform_1, window_bounds = array<i64: 1, 32, 1>}, {transform_indices = @transform_2, window_bounds = array<i64: 1, 32, 128>}]} {
    %c0 = arith.constant 0 : index
    %c0_0 = arith.constant 0 : index
    %c0_1 = arith.constant 0 : index
    %0 = vector.load %arg2[%c0, %c0_0, %c0_1] : memref<1x32x128xf32, #tpu.memory_space<vmem>>, vector<1x32x128xf32>
    %c0_2 = arith.constant 0 : index
    %c0_3 = arith.constant 0 : index
    %c0_4 = arith.constant 0 : index
    %1 = vector.load %arg3[%c0_2, %c0_3, %c0_4] : memref<1x32x1xf32, #tpu.memory_space<vmem>>, vector<1x32x1xf32>
    %cst = arith.constant dense<0.000000e+00> : vector<1x128xf32>
    %2 = vector.multi_reduction <add>, %0, %cst [1] : vector<1x32x128xf32> to vector<1x128xf32>
    %3 = vector.shape_cast %2 : vector<1x128xf32> to vector<1x1x128xf32>
    %cst_5 = arith.constant 3.200000e+01 : f32
    %4 = vector.broadcast %cst_5 : f32 to vector<1x1x128xf32>
    %5 = arith.divf %3, %4 : vector<1x1x128xf32>
    %6 = vector.broadcast %5 : vector<1x1x128xf32> to vector<1x32x128xf32>
    %7 = arith.subf %0, %6 : vector<1x32x128xf32>
    %8 = arith.mulf %7, %7 : vector<1x32x128xf32>
    %cst_6 = arith.constant dense<0.000000e+00> : vector<1x128xf32>
    %9 = vector.multi_reduction <add>, %8, %cst_6 [1] : vector<1x32x128xf32> to vector<1x128xf32>
    %10 = vector.shape_cast %9 : vector<1x128xf32> to vector<1x1x128xf32>
    %cst_7 = arith.constant 3.200000e+01 : f32
    %11 = vector.broadcast %cst_7 : f32 to vector<1x1x128xf32>
    %12 = arith.divf %10, %11 : vector<1x1x128xf32>
    %13 = vector.broadcast %5 : vector<1x1x128xf32> to vector<1x32x128xf32>
    %14 = arith.subf %0, %13 : vector<1x32x128xf32>
    %cst_8 = arith.constant 9.99999974E-6 : f32
    %15 = vector.broadcast %cst_8 : f32 to vector<1x1x128xf32>
    %16 = arith.addf %12, %15 : vector<1x1x128xf32>
    %17 = math.rsqrt %16 : vector<1x1x128xf32>
    %18 = vector.broadcast %17 : vector<1x1x128xf32> to vector<1x32x128xf32>
    %19 = arith.mulf %14, %18 : vector<1x32x128xf32>
    %20 = vector.broadcast %1 : vector<1x32x1xf32> to vector<1x32x128xf32>
    %21 = arith.mulf %19, %20 : vector<1x32x128xf32>
    %c0_9 = arith.constant 0 : index
    %c0_10 = arith.constant 0 : index
    %c0_11 = arith.constant 0 : index
    %22 = vector.load %arg4[%c0_9, %c0_10, %c0_11] : memref<1x32x128xf32, #tpu.memory_space<vmem>>, vector<1x32x128xf32>
    tpu.vector_store %arg4[%c0_9, %c0_10, %c0_11], %21 {strides = array<i32>} : memref<1x32x128xf32, #tpu.memory_space<vmem>>, vector<1x32x128xf32>,
    return
  }
  func.func @transform_0(%arg0: i32, %arg1: i32) -> (i32, i32, i32) {
    %c0_i32 = arith.constant 0 : i32
    %c0_i32_0 = arith.constant 0 : i32
    return %arg0, %c0_i32, %arg1 : i32, i32, i32
  }
  func.func @transform_1(%arg0: i32, %arg1: i32) -> (i32, i32, i32) {
    %c0_i32 = arith.constant 0 : i32
    %c0_i32_0 = arith.constant 0 : i32
    %c0_i32_1 = arith.constant 0 : i32
    %c0_i32_2 = arith.constant 0 : i32
    return %c0_i32, %c0_i32_0, %c0_i32_1 : i32, i32, i32
  }
  func.func @transform_2(%arg0: i32, %arg1: i32) -> (i32, i32, i32) {
    %c0_i32 = arith.constant 0 : i32
    %c0_i32_0 = arith.constant 0 : i32
    return %arg0, %c0_i32, %arg1 : i32, i32, i32
  }
}

</mosaic_0001>

<llo_original>
// kernel: tpu_custom_call.1
$region0: #{tpu_custom_call.1}
  #allocation0 [shape = 'u32[]', space=smem, size = 0x4, offset = 0x4, fixed_abs, tag = 'smem constant byte address 0x4 - core index']
  #allocation1 [shape = 'u32[144,128]{1,0:T(1,128)}', space=vmem, size = 0x12000, scoped, tag = 'internal scratch']
  %s0 = inlined_call_operand.hbm [shape: f32[2,32,128], index: 0, kind: input, shape index: {}]
  %s1 = inlined_call_operand.vmem [shape: f32[1,32,1], index: 1, kind: input, shape index: {}]
  %s2 = inlined_call_operand.hbm [shape: f32[2,32,128], index: 2, kind: output, shape index: {}]
  %s3 = sld [smem:[#allocation0]]
  $region45: #{tpu_custom_call.1} parent=0
    _
  %s5 = ssub.s32 1, %s3
  %s6 = scalar_select 0, %s5, %s3
  $region1: #{tpu_custom_call.1} parent=0
    #allocation2 [shape = 'u8[32768]{0}', space=vmem, size = 0x8000, scoped, tag = 'input window, operand 0']
    #allocation3 [shape = 's32[2]{0}', space=sflag, size = 0x8, scoped, tag = 'scoped memory for tpu_custom_call.1']
    #allocation4 [shape = 's32[2]{0}', space=sflag, size = 0x8, scoped, tag = 'scoped memory for tpu_custom_call.1']
    #allocation5 [shape = 'u8[32768]{0}', space=vmem, size = 0x8000, scoped, tag = 'output window, operand 0']
    %7 = vsyncpa [#allocation3], 0
    %s8 = scalar_lea.sflag [#allocation3], 1
    %9 = vsyncpa %s8, 0
    %10 = vsyncpa [#allocation4], 0
    %s11 = scalar_lea.sflag [#allocation4], 1
    %12 = vsyncpa %s11, 0
    loop: start=0, step=1, limit=4
    $region2: #{tpu_custom_call.1} parent=1 // loop_pre_header
      _
    $region3: #{tpu_custom_call.1} parent=1 // loop_header
      %s14 = sphi 0, %s18
      %p15 = scmp.ge.s32.totalorder %s14, 4
      %s21 = sphi 0, %s33
      %s22 = sphi 0, %s29
      %s23 = sphi 0, %s21
      %s24 = sphi 0, %s22
      %s25 = sphi 0, %s23
      %s26 = sphi 0, %s24
      %s38 = sphi 0, %s40
      %s41 = sphi 0, %s38
      %s42 = sphi 0, %s41
      %s58 = sphi 0, %s42
      %s62 = sphi 0, %s62
      %s64 = sphi 0, %s62
      %s65 = sphi 0, %s64
      %s79 = sphi 0, %s65
      %s87 = sphi 0, %s89
      %s90 = sphi 0, %s87
      %s91 = sphi 0, %s90
      %s107 = sphi 0, %s91
    $region4: #{tpu_custom_call.1} parent=1 // loop_header_branch
      %17 = sbr.rel (%p15) target = $region8
    $region5: #{tpu_custom_call.1} parent=1 // loop_body
      %s19 = ssub.s32 %s14, 1
      %s20 = ssub.s32 %s14, 2
      %s27 = sadd.s32 1, %s22
      %p28 = scmp.ge.s32.totalorder %s27, 1
      %s29 = scalar_select %p28, 0, %s27
      %s30 = sadd.s32 1, %s21
      %s31 = scalar_select %p28, %s30, %s21
      %p32 = scmp.ge.s32.totalorder %s31, 2
      %s33 = scalar_select %p32, 0, %s31
      %s34 = ssub.s32 %s21, %s33
      %s35 = ssub.s32 %s22, %s29
      %s36 = sor.u32 %s34, %s35
      %p37 = scmp.eq.s32.totalorder %s36, 0
      %s39 = sadd.s32 %s38, 1
      %s40 = scalar_select %p37, %s38, %s39
      %p43 = pneg %p37
      %p44 = scmp.eq.s32.totalorder %s14, 1
      %p45 = por %p43, %p44
      %p46 = scmp.ne.s32.totalorder %s38, %s41
      %p47 = scmp.eq.s32.totalorder %s14, 0
      %p48 = por %p46, %p47
      %p49 = scmp.ne.s32.totalorder %s38, %s41
      %p50 = scmp.eq.s32.totalorder %s19, 1
      %p51 = por %p49, %p50
      %p52 = scmp.ne.s32.totalorder %s41, %s42
      %p53 = scmp.eq.s32.totalorder %s19, 0
      %p54 = por %p52, %p53
      %p55 = scmp.ne.s32.totalorder %s41, %s42
      %p56 = scmp.eq.s32.totalorder %s20, 1
      %p57 = por %p55, %p56
      %p59 = scmp.ne.s32.totalorder %s42, %s58
      %p60 = scmp.eq.s32.totalorder %s20, 0
      %p61 = por %p59, %p60
      %s63 = sadd.s32 %s62, 1
      %p66 = scmp.eq.s32.totalorder %s14, 1
      %p67 = scmp.ne.s32.totalorder %s62, %s64
      %p68 = scmp.eq.s32.totalorder %s14, 0
      %p69 = por %p67, %p68
      %p70 = scmp.ne.s32.totalorder %s62, %s64
      %p71 = scmp.eq.s32.totalorder %s19, 1
      %p72 = por %p70, %p71
      %p73 = scmp.ne.s32.totalorder %s64, %s65
      %p74 = scmp.eq.s32.totalorder %s19, 0
      %p75 = por %p73, %p74
      %p76 = scmp.ne.s32.totalorder %s64, %s65
      %p77 = scmp.eq.s32.totalorder %s20, 1
      %p78 = por %p76, %p77
      %p80 = scmp.ne.s32.totalorder %s65, %s79
      %p81 = scmp.eq.s32.totalorder %s20, 0
      %p82 = por %p80, %p81
      %s83 = ssub.s32 %s21, %s33
      %s84 = ssub.s32 %s22, %s29
      %s85 = sor.u32 %s83, %s84
      %p86 = scmp.eq.s32.totalorder %s85, 0
      %s88 = sadd.s32 %s87, 1
      %s89 = scalar_select %p86, %s87, %s88
      %p92 = pneg %p86
      %p93 = scmp.eq.s32.totalorder %s14, 1
      %p94 = por %p92, %p93
      %p95 = scmp.ne.s32.totalorder %s87, %s90
      %p96 = scmp.eq.s32.totalorder %s14, 0
      %p97 = por %p95, %p96
      %p98 = scmp.ne.s32.totalorder %s87, %s90
      %p99 = scmp.eq.s32.totalorder %s19, 1
      %p100 = por %p98, %p99
      %p101 = scmp.ne.s32.totalorder %s90, %s91
      %p102 = scmp.eq.s32.totalorder %s19, 0
      %p103 = por %p101, %p102
      %p104 = scmp.ne.s32.totalorder %s90, %s91
      %p105 = scmp.eq.s32.totalorder %s20, 1
      %p106 = por %p104, %p105
      %p108 = scmp.ne.s32.totalorder %s91, %s107
      %p109 = scmp.eq.s32.totalorder %s20, 0
      %p110 = por %p108, %p109
      %p111 = scmp.le.s32.totalorder 1, %s14
      %p112 = scmp.lt.s32.totalorder %s14, 3
      %p113 = pnand %p111, %p112
      %p114 = pneg %p113
      // Predicated region
      $region9: #{tpu_custom_call.1} parent=5 // pred_check
        _
      $region10: #{tpu_custom_call.1} parent=5 // pred_check_branch
        %116 = sbr.rel (%p113) target = $region12
      $region11: #{tpu_custom_call.1} parent=5 // pred_region
        %s117 = ssub.s32 %s14, 1
        // Predicated region
        $region13: #{tpu_custom_call.1} parent=11 // pred_check
          %p118 = pneg %p75
        $region14: #{tpu_custom_call.1} parent=11 // pred_check_branch
          %120 = sbr.rel (%p118) target = $region16
        $region15: #{tpu_custom_call.1} parent=11 // pred_region
          _
        $region16: #{tpu_custom_call.1} parent=11 // pred_fallthru
          _
      $region12: #{tpu_custom_call.1} parent=5 // pred_fallthru
        _
      %p121 = scmp.lt.s32.totalorder %s14, 2
      // Predicated region
      $region17: #{tpu_custom_call.1} parent=5 // pred_check
        %p122 = pneg %p121
      $region18: #{tpu_custom_call.1} parent=5 // pred_check_branch
        %124 = sbr.rel (%p122) target = $region20
      $region19: #{tpu_custom_call.1} parent=5 // pred_region
        // Predicated region
        $region21: #{tpu_custom_call.1} parent=19 // pred_check
          %p125 = pneg %p48
        $region22: #{tpu_custom_call.1} parent=19 // pred_check_branch
          %127 = sbr.rel (%p125) target = $region24
        $region23: #{tpu_custom_call.1} parent=19 // pred_region
          %s128 = sand.u32 %s38, 1
          %s129 = scalar_lea.sflag [#allocation3], %s128
          %s130 = sand.u32 %s38, 1
          %s131 = smul.addr %s130, 32
          %s132 = scalar_lea.vmem [#allocation2], %s131
          %s134 = ssub.s32 512, 512
          %135 = vsyncadd %s129, %s134
          %s136 = smul.addr %s21, 4
          %s137 = sadd.s32 %s22, %s136
          %s138 = smul.addr %s137, 128
          %s139 = scalar_lea.hbm %s0, %s138
          %s140 = sshll.u32 %s132, 4
          %s141 = int_to_ptr.vmem [resolvable:$true] %s140
          %146 = dma.hbm_to_vmem [thread:$0]  %s139, 512, %s141, %s129, 128, 128, 8
        $region24: #{tpu_custom_call.1} parent=19 // pred_fallthru
          _
      $region20: #{tpu_custom_call.1} parent=5 // pred_fallthru
        _
      %p147 = scmp.le.s32.totalorder 1, %s14
      %p148 = scmp.lt.s32.totalorder %s14, 3
      %p149 = pnand %p147, %p148
      %p150 = pneg %p149
      // Predicated region
      $region25: #{tpu_custom_call.1} parent=5 // pred_check
        _
      $region26: #{tpu_custom_call.1} parent=5 // pred_check_branch
        %152 = sbr.rel (%p149) target = $region28
      $region27: #{tpu_custom_call.1} parent=5 // pred_region
        %s153 = ssub.s32 %s14, 1
        %s154 = sand.u32 %s41, 1
        %s155 = scalar_lea.sflag [#allocation3], %s154
        %s156 = sand.u32 %s41, 1
        %s157 = smul.addr %s156, 32
        %s158 = scalar_lea.vmem [#allocation2], %s157
        // Predicated region
        $region29: #{tpu_custom_call.1} parent=27 // pred_check
          %p159 = pneg %p54
        $region30: #{tpu_custom_call.1} parent=27 // pred_check_branch
          %161 = sbr.rel (%p159) target = $region32
        $region31: #{tpu_custom_call.1} parent=27 // pred_region
          %162 = dma.done %s155, 512
        $region32: #{tpu_custom_call.1} parent=27 // pred_fallthru
          _
        %s163 = sand.u32 %s41, 1
        %s164 = scalar_lea.sflag [#allocation3], %s163
        %s165 = sand.u32 %s41, 1
        %s166 = smul.addr %s165, 32
        %s167 = scalar_lea.vmem [#allocation2], %s166
        %p168 = pneg %p54
        %p169 = pneg %p51
        %p170 = pneg %p75
        %p171 = pneg %p72
        %p172 = pneg %p103
        %p173 = pneg %p100
        %s174 = sand.u32 %s90, 1
        %s175 = scalar_lea.sflag [#allocation4], %s174
        %s176 = sand.u32 %s90, 1
        %s177 = smul.addr %s176, 32
        %s178 = scalar_lea.vmem [#allocation5], %s177
        %v179 = vld [vmem:[%s158] sm:$0xff]
        %v180 = vld [vmem:[%s158 + $0x8] sm:$0xff]
        %v181 = vld [vmem:[%s158 + $0x10] sm:$0xff]
        %v182 = vld [vmem:[%s158 + $0x18] sm:$0xff]
        %v183 = vld [vmem:[%s1] sm:$0xff]
        %v184 = vld [vmem:[%s1 + $0x8] sm:$0xff]
        %v185 = vld [vmem:[%s1 + $0x10] sm:$0xff]
        %v186 = vld [vmem:[%s1 + $0x18] sm:$0xff]
        %v187 = vadd.f32 %v179, %v180
        %v188 = vadd.f32 %v187, %v181
        %v189 = vadd.f32 %v188, %v182
        %v190 = vrot.slane %v189, 4
        %v191 = vadd.f32 %v189, %v190
        %v192 = vrot.slane %v191, 2
        %v193 = vadd.f32 %v191, %v192
        %v194 = vrot.slane %v193, 1
        %v195 = vadd.f32 %v193, %v194
        %v196 = vrcp.pop 32.0
        %v197 = vmul.f32 %v195, %v196
        %v198 = vsub.f32 %v179, %v197
        %v199 = vsub.f32 %v180, %v197
        %v200 = vsub.f32 %v181, %v197
        %v201 = vsub.f32 %v182, %v197
        %v202 = vmul.f32 %v198, %v198
        %v203 = vmul.f32 %v199, %v199
        %v204 = vmul.f32 %v200, %v200
        %v205 = vmul.f32 %v201, %v201
        %v206 = vadd.f32 %v202, %v203
        %v207 = vadd.f32 %v206, %v204
        %v208 = vadd.f32 %v207, %v205
        %v209 = vrot.slane %v208, 4
        %v210 = vadd.f32 %v208, %v209
        %v211 = vrot.slane %v210, 2
        %v212 = vadd.f32 %v210, %v211
        %v213 = vrot.slane %v212, 1
        %v214 = vadd.f32 %v212, %v213
        %v215 = vmul.f32 %v214, %v196
        %v216 = vadd.f32 %v215, 1e-05
        %v217 = vrsqrt.pop %v216
        %v218 = vmul.f32 %v198, %v217
        %v219 = vmul.f32 %v199, %v217
        %v220 = vmul.f32 %v200, %v217
        %v221 = vmul.f32 %v201, %v217
        %223 = vset.pattern.permute.xlu0 0
        %224 = vperm.xlu0 %223, %v183
        %v225 = vpop.permute.xlu0 %224
        %228 = vset.pattern.permute.xlu0 0
        %229 = vperm.xlu0 %228, %v184
        %v230 = vpop.permute.xlu0 %229
        %233 = vset.pattern.permute.xlu0 0
        %234 = vperm.xlu0 %233, %v185
        %v235 = vpop.permute.xlu0 %234
        %238 = vset.pattern.permute.xlu0 0
        %239 = vperm.xlu0 %238, %v186
        %v240 = vpop.permute.xlu0 %239
        %v242 = vmul.f32 %v218, %v225
        %v243 = vmul.f32 %v219, %v230
        %v244 = vmul.f32 %v220, %v235
        %v245 = vmul.f32 %v221, %v240
        %246 = vst [vmem:[%s178] sm:$0xff] %v242
        %247 = vst [vmem:[%s178 + $0x8] sm:$0xff] %v243
        %248 = vst [vmem:[%s178 + $0x10] sm:$0xff] %v244
        %249 = vst [vmem:[%s178 + $0x18] sm:$0xff] %v245
        %s250 = sand.u32 %s90, 1
        %s251 = scalar_lea.sflag [#allocation4], %s250
        %s252 = sand.u32 %s90, 1
        %s253 = smul.addr %s252, 32
        %s254 = scalar_lea.vmem [#allocation5], %s253
        // Predicated region
        $region33: #{tpu_custom_call.1} parent=27 // pred_check
          %p255 = pneg %p100
        $region34: #{tpu_custom_call.1} parent=27 // pred_check_branch
          %257 = sbr.rel (%p255) target = $region36
        $region35: #{tpu_custom_call.1} parent=27 // pred_region
          %s259 = ssub.s32 512, 512
          %260 = vsyncadd %s251, %s259
          %s261 = smul.addr %s23, 4
          %s262 = sadd.s32 %s24, %s261
          %s263 = smul.addr %s262, 128
          %s264 = scalar_lea.hbm %s2, %s263
          %s265 = sshll.u32 %s254, 4
          %s266 = int_to_ptr.vmem [resolvable:$true] %s265
          %271 = dma.vmem_to_hbm [thread:$0]  %s266, 512, %s264, %s251, 128, 128, 8
        $region36: #{tpu_custom_call.1} parent=27 // pred_fallthru
          _
      $region28: #{tpu_custom_call.1} parent=5 // pred_fallthru
        _
      %p272 = scmp.le.s32.totalorder 2, %s14
      // Predicated region
      $region37: #{tpu_custom_call.1} parent=5 // pred_check
        %p273 = pneg %p272
      $region38: #{tpu_custom_call.1} parent=5 // pred_check_branch
        %275 = sbr.rel (%p273) target = $region40
      $region39: #{tpu_custom_call.1} parent=5 // pred_region
        %s276 = ssub.s32 %s14, 2
        // Predicated region
        $region41: #{tpu_custom_call.1} parent=39 // pred_check
          %p277 = pneg %p106
        $region42: #{tpu_custom_call.1} parent=39 // pred_check_branch
          %279 = sbr.rel (%p277) target = $region44
        $region43: #{tpu_custom_call.1} parent=39 // pred_region
          %s280 = sand.u32 %s91, 1
          %s281 = scalar_lea.sflag [#allocation4], %s280
          %s282 = sand.u32 %s91, 1
          %s283 = smul.addr %s282, 32
          %s284 = scalar_lea.vmem [#allocation5], %s283
          %285 = dma.done %s281, 512
        $region44: #{tpu_custom_call.1} parent=39 // pred_fallthru
          _
      $region40: #{tpu_custom_call.1} parent=5 // pred_fallthru
        _
    $region6: #{tpu_custom_call.1} parent=1 // loop_footer
      %s18 = sadd.s32 1, %s14
    $region7: #{tpu_custom_call.1} parent=1 // loop_footer_branch
      %13 = sbr.rel target = $region3
    $region8: #{tpu_custom_call.1} parent=1 // loop_exit
      _
    %286 = vsyncpa [#allocation3], 1
    %s287 = scalar_lea.sflag [#allocation3], 1
    %288 = vsyncpa %s287, 1
    %289 = vsyncpa [#allocation4], 1
    %s290 = scalar_lea.sflag [#allocation4], 1
    %291 = vsyncpa %s290, 1

</llo_original>
